<compile_context>
chip_gen: v5e
topology: v5e:2x2
jax: 0.10.0
libtpu: 0.0.40
codegen_flags: <defaults>
</compile_context>

<pallas_src>
import functools

import jax
import jax.numpy as jnp
from jax import lax
from jax.experimental import pallas as pl
from jax.experimental.pallas import tpu as pltpu

# Finite stand-in for -inf: avoids (-inf) - (-inf) = NaN in the online-softmax rescale.
_MASK = float(jnp.finfo(jnp.float32).min)


def _round_up(x: int, m: int) -> int:
    return ((x + m - 1) // m) * m


def _sce_kernel(parts_ref, ct_ref, diag_ref, out_ref, m_ref, l_ref, *,
                n_valid: int, block_n: int, needs_mask: bool):
    """grid = (K tiles, N tiles).  parts_ref: (tm, Dp), ct_ref: (Dp, tn),
    diag_ref: (tm, Dp) (= centers rows e of this K tile), out_ref: (tm, 1)."""
    j = pl.program_id(1)
    nj = pl.num_programs(1)

    @pl.when(j == 0)
    def _init():
        m_ref[...] = jnp.full_like(m_ref, _MASK)
        l_ref[...] = jnp.zeros_like(l_ref)

    # (tm, tn) logits tile on the MXU; bf16 (or f32) operands, f32 accumulation.
    logits = jnp.dot(parts_ref[...], ct_ref[...],
                     preferred_element_type=jnp.float32)

    if needs_mask:  # static (trace-time) decision: only emitted when N was padded
        col = j * block_n + lax.broadcasted_iota(jnp.int32, logits.shape, 1)
        logits = jnp.where(col < n_valid, logits, _MASK)

    # Online (flash-style) logsumexp over the streamed N axis.
    m_prev = m_ref[...]
    m_new = jnp.maximum(m_prev, jnp.max(logits, axis=1, keepdims=True))
    p = jnp.exp(logits - m_new)
    l_ref[...] = jnp.exp(m_prev - m_new) * l_ref[...] + jnp.sum(p, axis=1, keepdims=True)
    m_ref[...] = m_new

    @pl.when(j == nj - 1)
    def _finalize():
        # Diagonal logit <parts[e], centers[e]> as a direct row-wise dot (f32).
        diag = jnp.sum(parts_ref[...].astype(jnp.float32)
                       * diag_ref[...].astype(jnp.float32),
                       axis=1, keepdims=True)
        lse = m_ref[...] + jnp.log(l_ref[...])
        out_ref[...] = lse - diag  # per-row contribution; wrapper does sum / K


def sce_loss(parts: jax.Array, centers: jax.Array, *,
             block_k: int = 256, block_n: int = 1024,
             compute_dtype=jnp.bfloat16) -> jax.Array:
    """parts: (K, D), centers: (N, D) with N >= K. Returns scalar f32 loss."""
    K, D = parts.shape
    N, D2 = centers.shape
    assert D == D2 and N >= K, "SCELoss requires centers rows >= parts rows (labels 0..K-1)"

    # Lane/sublane alignment and tile sizes.
    d_pad = _round_up(D, 128)                     # lane-dense contraction dim
    tm = min(block_k, _round_up(K, 8))            # sublane-aligned K tile
    k_pad = _round_up(K, tm)
    tn = min(block_n, _round_up(N, 128))          # lane-dense N tile
    n_pad = _round_up(N, tn)

    cdt = compute_dtype
    parts_p = jnp.zeros((k_pad, d_pad), cdt).at[:K, :D].set(parts.astype(cdt))
    # Pre-transpose centers once in XLA so the streamed tiles are (D, tn) lane-dense.
    centers_t = jnp.zeros((d_pad, n_pad), cdt).at[:D, :N].set(centers.T.astype(cdt))
    # Rows centers[e] (e = 0..K-1) used for the diagonal logit, laid out like parts.
    diag_p = jnp.zeros((k_pad, d_pad), cdt).at[:K, :D].set(centers[:K].astype(cdt))

    grid = (k_pad // tm, n_pad // tn)
    kernel = functools.partial(_sce_kernel, n_valid=N, block_n=tn,
                               needs_mask=(n_pad != N))

    per_row = pl.pallas_call(
        kernel,
        out_shape=jax.ShapeDtypeStruct((k_pad, 1), jnp.float32),
        grid_spec=pltpu.PrefetchScalarGridSpec(
            num_scalar_prefetch=0,
            grid=grid,
            in_specs=[
                pl.BlockSpec((tm, d_pad), lambda i, j: (i, 0)),   # parts tile
                pl.BlockSpec((d_pad, tn), lambda i, j: (0, j)),   # centers^T stream
                pl.BlockSpec((tm, d_pad), lambda i, j: (i, 0)),   # diagonal centers rows
            ],
            out_specs=pl.BlockSpec((tm, 1), lambda i, j: (i, 0)),
            scratch_shapes=[pltpu.VMEM((tm, 1), jnp.float32),     # running max m
                            pltpu.VMEM((tm, 1), jnp.float32)],    # running sum l
        ),
        compiler_params=pltpu.CompilerParams(
            dimension_semantics=("parallel", "arbitrary")),       # K across TCs, N = reduction
    )(parts_p, centers_t, diag_p)

    # loss = -(1/K) * sum_e (diag_e - lse_e) = (1/K) * sum_e (lse_e - diag_e)
    return jnp.sum(per_row[:K, 0]) / K


# -------------------- pure-JAX references --------------------
def _sce_loss_ref(parts, centers):
    # Written exactly like the PyTorch loop (vectorized, unstable exp form).
    logits = parts @ centers.T                      # (K, N)
    per = jnp.log(jnp.exp(jnp.diagonal(logits)) / jnp.sum(jnp.exp(logits), axis=1))
    return -jnp.sum(per) / parts.shape[0]


def _sce_loss_ref_stable(parts, centers):
    logits = parts @ centers.T
    lse = jax.scipy.special.logsumexp(logits, axis=1)
    return -jnp.sum(jnp.diagonal(logits) - lse) / parts.shape[0]


if __name__ == "__main__":
    key = jax.random.PRNGKey(0)
    k1, k2 = jax.random.split(key)
    K, N, D = 8, 16, 32
    parts = 0.1 * jax.random.normal(k1, (K, D), dtype=jnp.float32)
    centers = 0.1 * jax.random.normal(k2, (N, D), dtype=jnp.float32)

    # bf16-MXU path vs. the literal (unstable) PyTorch formula.
    loss = jax.block_until_ready(sce_loss(parts, centers))
    ref = _sce_loss_ref(parts, centers)
    assert jnp.allclose(loss, ref, atol=2e-3, rtol=2e-3), (loss, ref)

    # f32 path with large logits: original formula overflows, kernel's stable
    # online logsumexp matches the stable reference.
    big_p, big_c = 50.0 * parts, 50.0 * centers
    loss_big = jax.block_until_ready(
        sce_loss(big_p, big_c, compute_dtype=jnp.float32))
    ref_big = _sce_loss_ref_stable(big_p, big_c)
    assert jnp.allclose(loss_big, ref_big, atol=1e-2, rtol=1e-3), (loss_big, ref_big)

    print("KERNEL_OK")
</pallas_src>

<mosaic_0001>
module attributes {stable_mosaic.version = 11 : i64} {
  func.func @_sce_kernel(%arg0: i32, %arg1: i32, %arg2: memref<8x128xbf16, #tpu.memory_space<vmem>>, %arg3: memref<128x128xbf16, #tpu.memory_space<vmem>>, %arg4: memref<8x128xbf16, #tpu.memory_space<vmem>>, %arg5: memref<8x1xf32, #tpu.memory_space<vmem>>, %arg6: memref<8x1xf32, #tpu.memory_space<vmem>>, %arg7: memref<8x1xf32, #tpu.memory_space<vmem>>) attributes {dimension_semantics = [#tpu.dimension_semantics<parallel>, #tpu.dimension_semantics<arbitrary>], iteration_bounds = array<i64: 1, 1>, scalar_prefetch = 0 : i64, scratch_operands = 2 : i64, tpu.core_type = #tpu.core_type<tc>, window_params = [{transform_indices = @transform_0, window_bounds = array<i64: 8, 128>}, {transform_indices = @transform_1, window_bounds = array<i64: 128, 128>}, {transform_indices = @transform_2, window_bounds = array<i64: 8, 128>}, {transform_indices = @transform_3, window_bounds = array<i64: 8, 1>}]} {
    %c0_i32 = arith.constant 0 : i32
    %0 = arith.cmpi eq, %arg1, %c0_i32 : i32
    %1 = arith.extui %0 : i1 to i32
    %c0_i32_0 = arith.constant 0 : i32
    %2 = arith.cmpi ne, %1, %c0_i32_0 : i32
    scf.if %2 {
      %cst_17 = arith.constant -3.40282347E+38 : f32
      %33 = vector.broadcast %cst_17 : f32 to vector<8x1xf32>
      %c0_18 = arith.constant 0 : index
      %c0_19 = arith.constant 0 : index
      %34 = vector.load %arg6[%c0_18, %c0_19] : memref<8x1xf32, #tpu.memory_space<vmem>>, vector<8x1xf32>
      tpu.vector_store %arg6[%c0_18, %c0_19], %33 {strides = array<i32>} : memref<8x1xf32, #tpu.memory_space<vmem>>, vector<8x1xf32>,
      %cst_20 = arith.constant 0.000000e+00 : f32
      %35 = vector.broadcast %cst_20 : f32 to vector<8x1xf32>
      %c0_21 = arith.constant 0 : index
      %c0_22 = arith.constant 0 : index
      %36 = vector.load %arg7[%c0_21, %c0_22] : memref<8x1xf32, #tpu.memory_space<vmem>>, vector<8x1xf32>
      tpu.vector_store %arg7[%c0_21, %c0_22], %35 {strides = array<i32>} : memref<8x1xf32, #tpu.memory_space<vmem>>, vector<8x1xf32>,
    } else {
    }
    %c0 = arith.constant 0 : index
    %c0_1 = arith.constant 0 : index
    %3 = vector.load %arg2[%c0, %c0_1] : memref<8x128xbf16, #tpu.memory_space<vmem>>, vector<8x128xbf16>
    %c0_2 = arith.constant 0 : index
    %c0_3 = arith.constant 0 : index
    %4 = vector.load %arg3[%c0_2, %c0_3] : memref<128x128xbf16, #tpu.memory_space<vmem>>, vector<128x128xbf16>
    %cst = arith.constant dense<0.000000e+00> : vector<8x128xf32>
    %5 = tpu.matmul %3, %4, %cst {dimension_numbers = #tpu.dot_dimension_numbers<[1], [0], [0], [1], [0, 0, 1, 1], [], []>} : vector<8x128xbf16>, vector<128x128xbf16>, vector<8x128xf32> -> vector<8x128xf32>
    %c128_i32 = arith.constant 128 : i32
    %6 = arith.muli %arg1, %c128_i32 : i32
    %7 = tpu.iota {dimensions = array<i32: 1>} : vector<8x128xi32>
    %8 = vector.broadcast %6 : i32 to vector<8x128xi32>
    %9 = arith.addi %8, %7 : vector<8x128xi32>
    %c16_i32 = arith.constant 16 : i32
    %10 = vector.broadcast %c16_i32 : i32 to vector<8x128xi32>
    %11 = arith.cmpi slt, %9, %10 : vector<8x128xi32>
    %cst_4 = arith.constant -3.40282347E+38 : f32
    %12 = vector.broadcast %cst_4 : f32 to vector<8x128xf32>
    %13 = arith.select %11, %5, %12 : vector<8x128xi1>, vector<8x128xf32>
    %c0_5 = arith.constant 0 : index
    %c0_6 = arith.constant 0 : index
    %14 = vector.load %arg6[%c0_5, %c0_6] : memref<8x1xf32, #tpu.memory_space<vmem>>, vector<8x1xf32>
    %cst_7 = arith.constant dense<0xFF800000> : vector<8xf32>
    %15 = vector.multi_reduction <maximumf>, %13, %cst_7 [1] : vector<8x128xf32> to vector<8xf32>
    %16 = vector.shape_cast %15 : vector<8xf32> to vector<8x1xf32>
    %17 = arith.maximumf %14, %16 : vector<8x1xf32>
    %18 = vector.broadcast %17 : vector<8x1xf32> to vector<8x128xf32>
    %19 = arith.subf %13, %18 : vector<8x128xf32>
    %20 = math.exp %19 : vector<8x128xf32>
    %21 = arith.subf %14, %17 : vector<8x1xf32>
    %22 = math.exp %21 : vector<8x1xf32>
    %c0_8 = arith.constant 0 : index
    %c0_9 = arith.constant 0 : index
    %23 = vector.load %arg7[%c0_8, %c0_9] : memref<8x1xf32, #tpu.memory_space<vmem>>, vector<8x1xf32>
    %24 = arith.mulf %22, %23 : vector<8x1xf32>
    %cst_10 = arith.constant dense<0.000000e+00> : vector<8xf32>
    %25 = vector.multi_reduction <add>, %20, %cst_10 [1] : vector<8x128xf32> to vector<8xf32>
    %26 = vector.shape_cast %25 : vector<8xf32> to vector<8x1xf32>
    %27 = arith.addf %24, %26 : vector<8x1xf32>
    %c0_11 = arith.constant 0 : index
    %c0_12 = arith.constant 0 : index
    %28 = vector.load %arg7[%c0_11, %c0_12] : memref<8x1xf32, #tpu.memory_space<vmem>>, vector<8x1xf32>
    tpu.vector_store %arg7[%c0_11, %c0_12], %27 {strides = array<i32>} : memref<8x1xf32, #tpu.memory_space<vmem>>, vector<8x1xf32>,
    %c0_13 = arith.constant 0 : index
    %c0_14 = arith.constant 0 : index
    %29 = vector.load %arg6[%c0_13, %c0_14] : memref<8x1xf32, #tpu.memory_space<vmem>>, vector<8x1xf32>
    tpu.vector_store %arg6[%c0_13, %c0_14], %17 {strides = array<i32>} : memref<8x1xf32, #tpu.memory_space<vmem>>, vector<8x1xf32>,
    %c0_i32_15 = arith.constant 0 : i32
    %30 = arith.cmpi eq, %arg1, %c0_i32_15 : i32
    %31 = arith.extui %30 : i1 to i32
    %c0_i32_16 = arith.constant 0 : i32
    %32 = arith.cmpi ne, %31, %c0_i32_16 : i32
    scf.if %32 {
      %c0_17 = arith.constant 0 : index
      %c0_18 = arith.constant 0 : index
      %33 = vector.load %arg2[%c0_17, %c0_18] : memref<8x128xbf16, #tpu.memory_space<vmem>>, vector<8x128xbf16>
      %34 = arith.extf %33 : vector<8x128xbf16> to vector<8x128xf32>
      %c0_19 = arith.constant 0 : index
      %c0_20 = arith.constant 0 : index
      %35 = vector.load %arg4[%c0_19, %c0_20] : memref<8x128xbf16, #tpu.memory_space<vmem>>, vector<8x128xbf16>
      %36 = arith.extf %35 : vector<8x128xbf16> to vector<8x128xf32>
      %37 = arith.mulf %34, %36 : vector<8x128xf32>
      %cst_21 = arith.constant dense<0.000000e+00> : vector<8xf32>
      %38 = vector.multi_reduction <add>, %37, %cst_21 [1] : vector<8x128xf32> to vector<8xf32>
      %39 = vector.shape_cast %38 : vector<8xf32> to vector<8x1xf32>
      %c0_22 = arith.constant 0 : index
      %c0_23 = arith.constant 0 : index
      %40 = vector.load %arg6[%c0_22, %c0_23] : memref<8x1xf32, #tpu.memory_space<vmem>>, vector<8x1xf32>
      %c0_24 = arith.constant 0 : index
      %c0_25 = arith.constant 0 : index
      %41 = vector.load %arg7[%c0_24, %c0_25] : memref<8x1xf32, #tpu.memory_space<vmem>>, vector<8x1xf32>
      %42 = math.log %41 : vector<8x1xf32>
      %43 = arith.addf %40, %42 : vector<8x1xf32>
      %44 = arith.subf %43, %39 : vector<8x1xf32>
      %c0_26 = arith.constant 0 : index
      %c0_27 = arith.constant 0 : index
      %45 = vector.load %arg5[%c0_26, %c0_27] : memref<8x1xf32, #tpu.memory_space<vmem>>, vector<8x1xf32>
      tpu.vector_store %arg5[%c0_26, %c0_27], %44 {strides = array<i32>} : memref<8x1xf32, #tpu.memory_space<vmem>>, vector<8x1xf32>,
    } else {
    }
    return
  }
  func.func @transform_0(%arg0: i32, %arg1: i32) -> (i32, i32) {
    %c0_i32 = arith.constant 0 : i32
    %c0_i32_0 = arith.constant 0 : i32
    return %arg0, %c0_i32 : i32, i32
  }
  func.func @transform_1(%arg0: i32, %arg1: i32) -> (i32, i32) {
    %c0_i32 = arith.constant 0 : i32
    %c0_i32_0 = arith.constant 0 : i32
    return %c0_i32, %arg1 : i32, i32
  }
  func.func @transform_2(%arg0: i32, %arg1: i32) -> (i32, i32) {
    %c0_i32 = arith.constant 0 : i32
    %c0_i32_0 = arith.constant 0 : i32
    return %arg0, %c0_i32 : i32, i32
  }
  func.func @transform_3(%arg0: i32, %arg1: i32) -> (i32, i32) {
    %c0_i32 = arith.constant 0 : i32
    %c0_i32_0 = arith.constant 0 : i32
    return %arg0, %c0_i32 : i32, i32
  }
}

</mosaic_0001>

<llo_original>
// kernel: tpu_custom_call.1
$region0: #{tpu_custom_call.1}
  #allocation0 [shape = 'u32[]', space=smem, size = 0x4, offset = 0x4, fixed_abs, tag = 'smem constant byte address 0x4 - core index']
  #allocation1 [shape = 'u32[72,128]{1,0:T(1,128)}', space=vmem, size = 0x9000, scoped, tag = 'internal scratch']
  #allocation2 [shape = 'f32[8,1]{1,0:T(8,128)}', space=vmem, size = 0x1000, scoped, tag = 'scratch operand']
  #allocation3 [shape = 'f32[8,1]{1,0:T(8,128)}', space=vmem, size = 0x1000, scoped, tag = 'scratch operand']
  %s0 = inlined_call_operand.hbm [shape: bf16[8,128], index: 0, kind: input, shape index: {}]
  %s1 = inlined_call_operand.hbm [shape: bf16[128,128], index: 1, kind: input, shape index: {}]
  %s2 = inlined_call_operand.hbm [shape: bf16[8,128], index: 2, kind: input, shape index: {}]
  %s3 = inlined_call_operand.vmem [shape: f32[8,1], index: 3, kind: output, shape index: {}]
  %s4 = sld [smem:[#allocation0]]
  $region42: #{tpu_custom_call.1} parent=0
    _
  %s6 = ssub.s32 1, %s4
  %s7 = scalar_select 0, %s6, %s4
  $region1: #{tpu_custom_call.1} parent=0
    #allocation4 [shape = 'u8[2048]{0}', space=vmem, size = 0x800, scoped, tag = 'input window, operand 0, single buffered']
    #allocation5 [shape = 's32[1]{0}', space=sflag, size = 0x4, scoped, tag = 'scoped memory for tpu_custom_call.1']
    #allocation6 [shape = 'u8[32768]{0}', space=vmem, size = 0x8000, scoped, tag = 'input window, operand 1, single buffered']
    #allocation7 [shape = 's32[1]{0}', space=sflag, size = 0x4, scoped, tag = 'scoped memory for tpu_custom_call.1']
    #allocation8 [shape = 'u8[2048]{0}', space=vmem, size = 0x800, scoped, tag = 'input window, operand 2, single buffered']
    %8 = vsyncpa [#allocation5], 0
    %9 = vsyncpa [#allocation7], 0
    // Predicated region
    $region2: #{tpu_custom_call.1} parent=1 // pred_check
      _
    $region3: #{tpu_custom_call.1} parent=1 // pred_check_branch
      %11 = sbr.rel (0) target = $region5
    $region4: #{tpu_custom_call.1} parent=1 // pred_region
      %13 = vsyncadd [#allocation5], 0
      %s15 = sshll.u32 %s0, 4
      %s16 = int_to_ptr.hbm [resolvable:$true] %s15
      %s17 = sshll.u32 [#allocation4], 4
      %s18 = int_to_ptr.vmem [resolvable:$true] %s17
      %20 = dma.hbm_to_vmem [thread:$0]  %s16, 64, %s18, [#allocation5]
    $region5: #{tpu_custom_call.1} parent=1 // pred_fallthru
      _
    // Predicated region
    $region6: #{tpu_custom_call.1} parent=1 // pred_check
      _
    $region7: #{tpu_custom_call.1} parent=1 // pred_check_branch
      %22 = sbr.rel (0) target = $region9
    $region8: #{tpu_custom_call.1} parent=1 // pred_region
      %24 = vsyncadd [#allocation7], 0
      %s25 = sshll.u32 %s1, 4
      %s26 = int_to_ptr.hbm [resolvable:$true] %s25
      %s27 = sshll.u32 [#allocation6], 4
      %s28 = int_to_ptr.vmem [resolvable:$true] %s27
      %33 = dma.hbm_to_vmem [thread:$0]  %s26, 1024, %s28, [#allocation7], 64, 64, 4
    $region9: #{tpu_custom_call.1} parent=1 // pred_fallthru
      _
    // Predicated region
    $region10: #{tpu_custom_call.1} parent=1 // pred_check
      _
    $region11: #{tpu_custom_call.1} parent=1 // pred_check_branch
      %35 = sbr.rel (0) target = $region13
    $region12: #{tpu_custom_call.1} parent=1 // pred_region
      %37 = vsyncadd [#allocation7], 0
      %s39 = sshll.u32 %s2, 4
      %s40 = int_to_ptr.hbm [resolvable:$true] %s39
      %s41 = sshll.u32 [#allocation8], 4
      %s42 = int_to_ptr.vmem [resolvable:$true] %s41
      %44 = dma.hbm_to_vmem [thread:$0]  %s40, 64, %s42, [#allocation7]
    $region13: #{tpu_custom_call.1} parent=1 // pred_fallthru
      _
    // Predicated region
    $region14: #{tpu_custom_call.1} parent=1 // pred_check
      _
    $region15: #{tpu_custom_call.1} parent=1 // pred_check_branch
      %46 = sbr.rel (0) target = $region17
    $region16: #{tpu_custom_call.1} parent=1 // pred_region
      %48 = dma.done [#allocation5], 64
    $region17: #{tpu_custom_call.1} parent=1 // pred_fallthru
      _
    // Predicated region
    $region18: #{tpu_custom_call.1} parent=1 // pred_check
      _
    $region19: #{tpu_custom_call.1} parent=1 // pred_check_branch
      %50 = sbr.rel (0) target = $region21
    $region20: #{tpu_custom_call.1} parent=1 // pred_region
      %52 = dma.done [#allocation7], 1024
    $region21: #{tpu_custom_call.1} parent=1 // pred_fallthru
      _
    // Predicated region
    $region22: #{tpu_custom_call.1} parent=1 // pred_check
      _
    $region23: #{tpu_custom_call.1} parent=1 // pred_check_branch
      %54 = sbr.rel (0) target = $region25
    $region24: #{tpu_custom_call.1} parent=1 // pred_region
      %56 = dma.done [#allocation7], 64
    $region25: #{tpu_custom_call.1} parent=1 // pred_fallthru
      _
    %p57 = scmp.eq.s32.totalorder 0, 0
    // Predicated region
    $region26: #{tpu_custom_call.1} parent=1 // pred_check
      %p58 = pneg %p57
    $region27: #{tpu_custom_call.1} parent=1 // pred_check_branch
      %60 = sbr.rel (%p58) target = $region29
    $region28: #{tpu_custom_call.1} parent=1 // pred_region
      %vm61 = vcmask 7168
      %62 = vst.msk [vmem:[#allocation2] sm:$0xff] %vm61, -3.4028235e+38
      %63 = vst.msk [vmem:[#allocation3] sm:$0xff] %vm61, 0.0
    $region29: #{tpu_custom_call.1} parent=1 // pred_fallthru
      _
    %v64 = vld [vmem:[#allocation4] sm:$0xf]
    %v65 = vld [vmem:[#allocation6] sm:$0xf]
    %v66 = vld [vmem:[#allocation6 + $0x4] sm:$0xf]
    %v67 = vld [vmem:[#allocation6 + $0x8] sm:$0xf]
    %v68 = vld [vmem:[#allocation6 + $0xc] sm:$0xf]
    %v69 = vld [vmem:[#allocation6 + $0x10] sm:$0xf]
    %v70 = vld [vmem:[#allocation6 + $0x14] sm:$0xf]
    %v71 = vld [vmem:[#allocation6 + $0x18] sm:$0xf]
    %v72 = vld [vmem:[#allocation6 + $0x1c] sm:$0xf]
    %v73 = vld [vmem:[#allocation6 + $0x20] sm:$0xf]
    %v74 = vld [vmem:[#allocation6 + $0x24] sm:$0xf]
    %v75 = vld [vmem:[#allocation6 + $0x28] sm:$0xf]
    %v76 = vld [vmem:[#allocation6 + $0x2c] sm:$0xf]
    %v77 = vld [vmem:[#allocation6 + $0x30] sm:$0xf]
    %v78 = vld [vmem:[#allocation6 + $0x34] sm:$0xf]
    %v79 = vld [vmem:[#allocation6 + $0x38] sm:$0xf]
    %v80 = vld [vmem:[#allocation6 + $0x3c] sm:$0xf]
    %v97 = vunpack.c.l.b16 %v65
    %v98 = vunpack.c.l.b16 %v66
    %v99 = vunpack.c.l.b16 %v67
    %v100 = vunpack.c.l.b16 %v68
    %v101 = vunpack.c.l.b16 %v69
    %v102 = vunpack.c.l.b16 %v70
    %v103 = vunpack.c.l.b16 %v71
    %v104 = vunpack.c.l.b16 %v72
    %v105 = vunpack.c.l.b16 %v73
    %v106 = vunpack.c.l.b16 %v74
    %v107 = vunpack.c.l.b16 %v75
    %v108 = vunpack.c.l.b16 %v76
    %v109 = vunpack.c.l.b16 %v77
    %v110 = vunpack.c.l.b16 %v78
    %v111 = vunpack.c.l.b16 %v79
    %v112 = vunpack.c.l.b16 %v80
    %v113 = vpack.c.b16 %v98, %v97
    %v114 = vpack.c.b16 %v100, %v99
    %v115 = vpack.c.b16 %v102, %v101
    %v116 = vpack.c.b16 %v104, %v103
    %v117 = vpack.c.b16 %v106, %v105
    %v118 = vpack.c.b16 %v108, %v107
    %v119 = vpack.c.b16 %v110, %v109
    %v120 = vpack.c.b16 %v112, %v111
    %129 = vmatpush.bf16.msra.mxu0 %v120
    %130 = vmatpush.bf16.msra.mxu0 %v119
    %131 = vmatpush.bf16.msra.mxu0 %v118
    %132 = vmatpush.bf16.msra.mxu0 %v117
    %133 = vmatpush.bf16.msra.mxu0 %v116
    %134 = vmatpush.bf16.msra.mxu0 %v115
    %135 = vmatpush.bf16.msra.mxu0 %v114
    %136 = vmatpush.bf16.msra.mxu0 %v113
    %137 = vmatmul.bf16.gmra.mxu0 %v64
    %v138 = vpop.f32.mrf.mxu0
    %v139 = vadd.f32 0.0, %v138
    %v140 = vpop.f32.mrf.mxu0
    %141 = vdwg.mxu0
    %s142 = smul.u32 0, 128
    %v143 = vlaneseq
    %v144 = vand.u32 %v143, 127
    %v145 = vstv %s142
    %v146 = vadd.s32 %v145, %v144
    %vm147 = vcmp.lt.s32.totalorder %v146, 16
    %v148 = vsel %vm147, %v139, -3.4028235e+38
    %v149 = vld [vmem:[#allocation2] sm:$0xff]
    %150 = vmax.xlane.f32.xlu0 %v148
    %v151 = vpop.xlane.xlu0 %150
    %v152 = vmax.f32 %v149, %v151
    %154 = vset.pattern.permute.xlu0 0
    %155 = vperm.xlu0 %154, %v152
    %v156 = vpop.permute.xlu0 %155
    %v158 = vsub.f32 %v148, %v156
    %v159 = vmul.f32 %v158, 1.442695
    %v160 = vpow.pop %v159
    %v161 = vsub.f32 %v149, %v152
    %v162 = vmul.f32 %v161, 1.442695
    %v163 = vpow.pop %v162
    %v164 = vld [vmem:[#allocation3] sm:$0xff]
    %v165 = vmul.f32 %v163, %v164
    %166 = vadd.xlane.f32.xlu0 %v160
    %v167 = vpop.xlane.xlu0 %166
    %v168 = vadd.f32 %v165, %v167
    %vm169 = vcmask 7168
    %170 = vst.msk [vmem:[#allocation3] sm:$0xff] %vm169, %v168
    %171 = vst.msk [vmem:[#allocation2] sm:$0xff] %vm169, %v152
    // Predicated region
    $region30: #{tpu_custom_call.1} parent=1 // pred_check
      %p172 = pneg %p57
    $region31: #{tpu_custom_call.1} parent=1 // pred_check_branch
      %174 = sbr.rel (%p172) target = $region33
    $region32: #{tpu_custom_call.1} parent=1 // pred_region
      %v175 = vld [vmem:[#allocation4] sm:$0xf]
      %v176 = vunpack.c.l.bf16 %v175
      %v177 = vld [vmem:[#allocation8] sm:$0xf]
      %v178 = vunpack.c.l.bf16 %v177
      %v179 = vmul.f32 %v176, %v178
      %180 = vadd.xlane.f32.xlu0 %v179
      %v181 = vpop.xlane.xlu0 %180
      %v182 = vld [vmem:[#allocation2] sm:$0xff]
      %v183 = vld [vmem:[#allocation3] sm:$0xff]
      %v184 = vlog2.pop %v183
      %v185 = vmul.f32 %v184, 0.6931472
      %v186 = vadd.f32 %v182, %v185
      %v187 = vsub.f32 %v186, %v181
      %188 = vst.msk [vmem:[%s3] sm:$0xff] %vm169, %v187
    $region33: #{tpu_custom_call.1} parent=1 // pred_fallthru
      _
    // Predicated region
    $region34: #{tpu_custom_call.1} parent=1 // pred_check
      _
    $region35: #{tpu_custom_call.1} parent=1 // pred_check_branch
      %190 = sbr.rel (0) target = $region37
    $region36: #{tpu_custom_call.1} parent=1 // pred_region
      _
    $region37: #{tpu_custom_call.1} parent=1 // pred_fallthru
      _
    // Predicated region
    $region38: #{tpu_custom_call.1} parent=1 // pred_check
      _
    $region39: #{tpu_custom_call.1} parent=1 // pred_check_branch
      %192 = sbr.rel (0) target = $region41
    $region40: #{tpu_custom_call.1} parent=1 // pred_region
      _
    $region41: #{tpu_custom_call.1} parent=1 // pred_fallthru
      _
    %193 = vsyncpa [#allocation5], 1
    %194 = vsyncpa [#allocation7], 1

</llo_original>
